<compile_context>
chip_gen: v6e
topology: v6e:2x2x1
jax: 0.10.0
libtpu: 0.0.40
codegen_flags: <defaults>
</compile_context>

<pallas_src>
import functools

import numpy as np
import jax
import jax.numpy as jnp
from jax import lax
from jax.experimental import pallas as pl
from jax.experimental.pallas import tpu as pltpu


def _round_up(v, m):
    return (v + m - 1) // m * m


def _group_scale_shift(mean_c, inv_c, w, b):
    """Fold GroupNorm normalization + affine into per-channel scale/shift."""
    scale = inv_c * w                 # (C,1)
    shift = b - mean_c * scale        # (C,1)
    return scale, shift


def _gate_and_reconstruct(xs, gn, wg, gate_threshold, half, o_ref):
    """Shared SRU gating + half-channel swap (single XLU roll)."""
    rw = jax.nn.sigmoid(gn * wg)                       # (C,S)
    prod = rw * xs                                     # rw*x computed once
    keep = rw > gate_threshold
    x1 = jnp.where(keep, xs, prod)                     # w1*x
    x2 = jnp.where(keep, jnp.float32(0.0), prod)       # w2*x
    # top = x1[:half]+x2[half:], bot = x1[half:]+x2[:half]  ==  x1 + roll(x2, half)
    o_ref[...] = (x1 + pltpu.roll(x2, shift=half, axis=0)).astype(o_ref.dtype)


def _sru_fused_kernel(x_ref, p_ref, o_ref, *, group_num, gate_threshold, eps,
                      s_valid):
    """Single-pass SRU: one whole (C, S_pad) sample per grid step."""
    C, SP = x_ref.shape
    cg = C // group_num
    half = C // 2
    inv_cnt = 1.0 / float(cg * s_valid)
    n_pad = float(cg * (SP - s_valid))        # zero-padded lanes per group

    xs = x_ref[...].astype(jnp.float32)       # (C, SP)
    w = p_ref[:, 0:1]                         # gamma      (C,1)
    b = p_ref[:, 1:2]                         # beta       (C,1)
    wg = p_ref[:, 2:3]                        # w_gamma    (C,1)

    # ---- GroupNorm statistics: two-pass, no MXU / no (C,C) mask ----
    sum_c = jnp.sum(xs, axis=1, keepdims=True)                         # (C,1)
    mean_g = [jnp.sum(sum_c[g * cg:(g + 1) * cg, :], keepdims=True) * inv_cnt
              for g in range(group_num)]                               # G x (1,1)
    mean_c = jnp.concatenate(
        [jnp.broadcast_to(m, (cg, 1)) for m in mean_g], axis=0)        # (C,1)

    d = xs - mean_c                                                    # centered
    sq_c = jnp.sum(d * d, axis=1, keepdims=True)                       # (C,1)
    # padded lanes hold x == 0 -> d == -mean there; remove their contribution.
    inv_g = [lax.rsqrt((jnp.sum(sq_c[g * cg:(g + 1) * cg, :], keepdims=True)
                        - n_pad * mean_g[g] * mean_g[g]) * inv_cnt + eps)
             for g in range(group_num)]
    inv_c = jnp.concatenate(
        [jnp.broadcast_to(v, (cg, 1)) for v in inv_g], axis=0)         # (C,1)

    gn = d * (inv_c * w) + b                                           # (C,SP)
    _gate_and_reconstruct(xs, gn, wg, gate_threshold, half, o_ref)


def _sru_stats_kernel(x_ref, stats_ref, *, group_num):
    """Phase 1 of the tiled path: accumulate per-group sum / sumsq over S tiles."""
    C, _ = x_ref.shape
    cg = C // group_num
    xs = x_ref[...].astype(jnp.float32)
    sum_c = jnp.sum(xs, axis=1, keepdims=True)          # (C,1)
    sq_c = jnp.sum(xs * xs, axis=1, keepdims=True)      # (C,1)
    partial = jnp.concatenate(
        [jnp.concatenate(
            [jnp.sum(sum_c[g * cg:(g + 1) * cg, :], keepdims=True),
             jnp.sum(sq_c[g * cg:(g + 1) * cg, :], keepdims=True)], axis=1)
         for g in range(group_num)], axis=0)            # (G,2)

    @pl.when(pl.program_id(1) == 0)
    def _():
        stats_ref[...] = jnp.zeros_like(stats_ref)

    stats_ref[...] += partial


def _sru_apply_kernel(x_ref, stats_ref, p_ref, o_ref, *, group_num,
                      gate_threshold, eps, s_valid):
    """Phase 2 of the tiled path: apply GN + gating + reconstruct per S tile."""
    C, _ = x_ref.shape
    cg = C // group_num
    half = C // 2
    inv_cnt = 1.0 / float(cg * s_valid)

    st = stats_ref[...]                                  # (G,2): [sum, sumsq]
    mean_v = st[:, 0:1] * inv_cnt                        # (G,1)
    var_v = st[:, 1:2] * inv_cnt - mean_v * mean_v
    inv_v = lax.rsqrt(var_v + eps)
    mean_c = jnp.concatenate(
        [jnp.broadcast_to(mean_v[g:g + 1, :], (cg, 1)) for g in range(group_num)],
        axis=0)                                          # (C,1)
    inv_c = jnp.concatenate(
        [jnp.broadcast_to(inv_v[g:g + 1, :], (cg, 1)) for g in range(group_num)],
        axis=0)                                          # (C,1)

    w = p_ref[:, 0:1]
    b = p_ref[:, 1:2]
    wg = p_ref[:, 2:3]
    scale, shift = _group_scale_shift(mean_c, inv_c, w, b)

    xs = x_ref[...].astype(jnp.float32)
    gn = xs * scale + shift
    _gate_and_reconstruct(xs, gn, wg, gate_threshold, half, o_ref)


def sru_pallas(x, gn_weight, gn_bias, *, group_num=16, gate_threshold=0.5,
               eps=1e-5, max_vmem_bytes=40 * 1024 * 1024, spatial_tile=2048,
               force_tiled=False):
    """SRU forward for NCDHW input. Chooses whole-sample vs S-tiled two-phase."""
    N, C, D, H, W = x.shape
    assert C % group_num == 0 and C % 2 == 0
    S = D * H * W
    itemsize = jnp.dtype(x.dtype).itemsize

    # Per-lane-column VMEM footprint: double-buffered in/out blocks at the
    # input dtype plus ~6 live f32 (C, tile) temporaries inside the kernel.
    per_col = (4 * itemsize + 6 * 4) * C
    fits_single = per_col * _round_up(S, 128) + (2 << 20) <= max_vmem_bytes
    use_single = fits_single and not force_tiled

    # Pack GroupNorm params once: [gamma, beta, w_gamma, pad] -> (C, 4) f32.
    g32 = gn_weight.astype(jnp.float32)
    b32 = gn_bias.astype(jnp.float32)
    wg32 = g32 / jnp.sum(g32)
    params = jnp.stack([g32, b32, wg32, jnp.zeros_like(g32)], axis=1)

    if use_single:
        ts = _round_up(S, 128)
        s_pad = ts
    else:
        ts_cap = max(128, ((max_vmem_bytes - (2 << 20)) // per_col) // 128 * 128)
        ts = int(min(_round_up(spatial_tile, 128), ts_cap, _round_up(S, 128)))
        s_pad = _round_up(S, ts)

    x3 = x.reshape(N, C, S)
    if s_pad != S:
        x3 = jnp.pad(x3, ((0, 0), (0, 0), (0, s_pad - S)))  # zero pad (masked in stats)

    vmem_limit = int(min(max(per_col * ts + (2 << 20), 32 << 20), 128 << 20))

    if use_single:
        kern = functools.partial(_sru_fused_kernel, group_num=group_num,
                                 gate_threshold=gate_threshold, eps=eps,
                                 s_valid=S)
        out = pl.pallas_call(
            kern,
            out_shape=jax.ShapeDtypeStruct((N, C, s_pad), x.dtype),
            grid_spec=pltpu.PrefetchScalarGridSpec(
                num_scalar_prefetch=0,
                grid=(N,),
                in_specs=[pl.BlockSpec((None, C, s_pad), lambda n: (n, 0, 0)),
                          pl.BlockSpec((C, 4), lambda n: (0, 0))],
                out_specs=pl.BlockSpec((None, C, s_pad), lambda n: (n, 0, 0))),
            compiler_params=pltpu.CompilerParams(
                dimension_semantics=("parallel",),
                vmem_limit_bytes=vmem_limit),
        )(x3, params)
    else:
        num_tiles = s_pad // ts
        # Phase 1: per-(sample, group) sum / sumsq, reduced over S tiles.
        stats = pl.pallas_call(
            functools.partial(_sru_stats_kernel, group_num=group_num),
            out_shape=jax.ShapeDtypeStruct((N, group_num, 2), jnp.float32),
            grid_spec=pltpu.PrefetchScalarGridSpec(
                num_scalar_prefetch=0,
                grid=(N, num_tiles),
                in_specs=[pl.BlockSpec((None, C, ts), lambda n, s: (n, 0, s))],
                out_specs=pl.BlockSpec((None, group_num, 2),
                                       lambda n, s: (n, 0, 0))),
            compiler_params=pltpu.CompilerParams(
                dimension_semantics=("parallel", "arbitrary"),
                vmem_limit_bytes=vmem_limit),
        )(x3)
        # Phase 2: apply GN + gating + reconstruct; fully parallel grid.
        kern = functools.partial(_sru_apply_kernel, group_num=group_num,
                                 gate_threshold=gate_threshold, eps=eps,
                                 s_valid=S)
        out = pl.pallas_call(
            kern,
            out_shape=jax.ShapeDtypeStruct((N, C, s_pad), x.dtype),
            grid_spec=pltpu.PrefetchScalarGridSpec(
                num_scalar_prefetch=0,
                grid=(N, num_tiles),
                in_specs=[pl.BlockSpec((None, C, ts), lambda n, s: (n, 0, s)),
                          pl.BlockSpec((None, group_num, 2),
                                       lambda n, s: (n, 0, 0)),
                          pl.BlockSpec((C, 4), lambda n, s: (0, 0))],
                out_specs=pl.BlockSpec((None, C, ts), lambda n, s: (n, 0, s))),
            compiler_params=pltpu.CompilerParams(
                dimension_semantics=("parallel", "parallel"),
                vmem_limit_bytes=vmem_limit),
        )(x3, stats, params)

    if s_pad != S:
        out = out[:, :, :S]
    return out.reshape(N, C, D, H, W)


def sru_reference(x, weight, bias, group_num, gate_threshold, eps):
    """Pure-JAX replica of the PyTorch SRU forward (NCDHW)."""
    N, C, D, H, W = x.shape
    cg = C // group_num
    xg = x.reshape(N, group_num, cg, D, H, W)
    mean = xg.mean(axis=(2, 3, 4, 5), keepdims=True)
    var = xg.var(axis=(2, 3, 4, 5), keepdims=True)
    gn = ((xg - mean) / jnp.sqrt(var + eps)).reshape(N, C, D, H, W)
    gn = gn * weight[None, :, None, None, None] + bias[None, :, None, None, None]
    w_gamma = weight / jnp.sum(weight)
    rw = jax.nn.sigmoid(gn * w_gamma[None, :, None, None, None])
    w1 = jnp.where(rw > gate_threshold, 1.0, rw)
    w2 = jnp.where(rw > gate_threshold, 0.0, rw)
    x1 = w1 * x
    x2 = w2 * x
    half = C // 2
    return jnp.concatenate([x1[:, :half] + x2[:, half:],
                            x1[:, half:] + x2[:, :half]], axis=1)


if __name__ == "__main__":
    key = jax.random.PRNGKey(0)
    kx, kw, kb, kx2 = jax.random.split(key, 4)

    N, C, D, H, W = 2, 16, 4, 8, 8
    G = 4
    gate_threshold = 0.5
    eps = 1e-5

    x = jax.random.normal(kx, (N, C, D, H, W), dtype=jnp.float32)
    gn_weight = 1.0 + 0.1 * jax.random.normal(kw, (C,), dtype=jnp.float32)
    gn_bias = 0.1 * jax.random.normal(kb, (C,), dtype=jnp.float32)
    y_ref = sru_reference(x, gn_weight, gn_bias, G, gate_threshold, eps)

    # 1) auto-selected single-pass (whole-sample) path
    y = sru_pallas(x, gn_weight, gn_bias, group_num=G,
                   gate_threshold=gate_threshold, eps=eps)
    y = jax.block_until_ready(y)
    assert y.shape == (N, C, D, H, W)
    np.testing.assert_allclose(np.asarray(y), np.asarray(y_ref),
                               rtol=1e-4, atol=1e-4)

    # 2) forced two-phase S-tiled path (v7x-style tiling), small 128-lane tiles
    y_t = sru_pallas(x, gn_weight, gn_bias, group_num=G,
                     gate_threshold=gate_threshold, eps=eps,
                     force_tiled=True, spatial_tile=128)
    y_t = jax.block_until_ready(y_t)
    np.testing.assert_allclose(np.asarray(y_t), np.asarray(y_ref),
                               rtol=1e-4, atol=1e-4)

    # 3) non-128-multiple spatial size exercises the lane padding + stats mask
    x_odd = jax.random.normal(kx2, (N, C, 3, 5, 7), dtype=jnp.float32)
    y_odd = sru_pallas(x_odd, gn_weight, gn_bias, group_num=G,
                       gate_threshold=gate_threshold, eps=eps)
    y_odd = jax.block_until_ready(y_odd)
    y_odd_ref = sru_reference(x_odd, gn_weight, gn_bias, G, gate_threshold, eps)
    np.testing.assert_allclose(np.asarray(y_odd), np.asarray(y_odd_ref),
                               rtol=1e-4, atol=1e-4)

    print("KERNEL_OK")
</pallas_src>

<mosaic_0001>
module attributes {stable_mosaic.version = 11 : i64} {
  func.func @_sru_fused_kernel(%arg0: i32, %arg1: memref<1x16x256xf32, #tpu.memory_space<vmem>>, %arg2: memref<16x4xf32, #tpu.memory_space<vmem>>, %arg3: memref<1x16x256xf32, #tpu.memory_space<vmem>>) attributes {dimension_semantics = [#tpu.dimension_semantics<parallel>], iteration_bounds = array<i64: 2>, scalar_prefetch = 0 : i64, scratch_operands = 0 : i64, tpu.core_type = #tpu.core_type<tc>, window_params = [{transform_indices = @transform_0, window_bounds = array<i64: 1, 16, 256>}, {pipeline_mode = #tpu.pipeline_mode<synchronous>, transform_indices = @transform_1, window_bounds = array<i64: 16, 4>}, {transform_indices = @transform_2, window_bounds = array<i64: 1, 16, 256>}]} {
    %c0 = arith.constant 0 : index
    %c0_0 = arith.constant 0 : index
    %c0_1 = arith.constant 0 : index
    %0 = vector.load %arg1[%c0, %c0_0, %c0_1] : memref<1x16x256xf32, #tpu.memory_space<vmem>>, vector<1x16x256xf32>
    %1 = vector.shape_cast %0 : vector<1x16x256xf32> to vector<16x256xf32>
    %c0_2 = arith.constant 0 : index
    %c0_3 = arith.constant 0 : index
    %2 = vector.load %arg2[%c0_2, %c0_3] : memref<16x4xf32, #tpu.memory_space<vmem>>, vector<16x1xf32>
    %c0_4 = arith.constant 0 : index
    %c1 = arith.constant 1 : index
    %3 = vector.load %arg2[%c0_4, %c1] : memref<16x4xf32, #tpu.memory_space<vmem>>, vector<16x1xf32>
    %c0_5 = arith.constant 0 : index
    %c2 = arith.constant 2 : index
    %4 = vector.load %arg2[%c0_5, %c2] : memref<16x4xf32, #tpu.memory_space<vmem>>, vector<16x1xf32>
    %cst = arith.constant dense<0.000000e+00> : vector<16xf32>
    %5 = vector.multi_reduction <add>, %1, %cst [1] : vector<16x256xf32> to vector<16xf32>
    %6 = vector.shape_cast %5 : vector<16xf32> to vector<16x1xf32>
    %7 = vector.extract_strided_slice %6 {offsets = [0, 0], sizes = [4, 1], strides = [1, 1]} : vector<16x1xf32> to vector<4x1xf32>
    %8 = vector.shape_cast %7 : vector<4x1xf32> to vector<1x4x1xf32>
    %cst_6 = arith.constant dense<0.000000e+00> : vector<1xf32>
    %9 = vector.multi_reduction <add>, %8, %cst_6 [1, 2] : vector<1x4x1xf32> to vector<1xf32>
    %10 = vector.shape_cast %9 : vector<1xf32> to vector<1x1x1xf32>
    %11 = vector.extract %10[0, 0, 0] : f32 from vector<1x1x1xf32>
    %12 = vector.broadcast %11 : f32 to vector<1x1xf32>
    %cst_7 = arith.constant 9.765625E-4 : f32
    %13 = vector.broadcast %cst_7 : f32 to vector<1x1xf32>
    %14 = arith.mulf %12, %13 : vector<1x1xf32>
    %15 = vector.extract_strided_slice %6 {offsets = [4, 0], sizes = [4, 1], strides = [1, 1]} : vector<16x1xf32> to vector<4x1xf32>
    %16 = vector.shape_cast %15 : vector<4x1xf32> to vector<1x4x1xf32>
    %cst_8 = arith.constant dense<0.000000e+00> : vector<1xf32>
    %17 = vector.multi_reduction <add>, %16, %cst_8 [1, 2] : vector<1x4x1xf32> to vector<1xf32>
    %18 = vector.shape_cast %17 : vector<1xf32> to vector<1x1x1xf32>
    %19 = vector.extract %18[0, 0, 0] : f32 from vector<1x1x1xf32>
    %20 = vector.broadcast %19 : f32 to vector<1x1xf32>
    %cst_9 = arith.constant 9.765625E-4 : f32
    %21 = vector.broadcast %cst_9 : f32 to vector<1x1xf32>
    %22 = arith.mulf %20, %21 : vector<1x1xf32>
    %23 = vector.extract_strided_slice %6 {offsets = [8, 0], sizes = [4, 1], strides = [1, 1]} : vector<16x1xf32> to vector<4x1xf32>
    %24 = vector.shape_cast %23 : vector<4x1xf32> to vector<1x4x1xf32>
    %cst_10 = arith.constant dense<0.000000e+00> : vector<1xf32>
    %25 = vector.multi_reduction <add>, %24, %cst_10 [1, 2] : vector<1x4x1xf32> to vector<1xf32>
    %26 = vector.shape_cast %25 : vector<1xf32> to vector<1x1x1xf32>
    %27 = vector.extract %26[0, 0, 0] : f32 from vector<1x1x1xf32>
    %28 = vector.broadcast %27 : f32 to vector<1x1xf32>
    %cst_11 = arith.constant 9.765625E-4 : f32
    %29 = vector.broadcast %cst_11 : f32 to vector<1x1xf32>
    %30 = arith.mulf %28, %29 : vector<1x1xf32>
    %31 = vector.extract_strided_slice %6 {offsets = [12, 0], sizes = [4, 1], strides = [1, 1]} : vector<16x1xf32> to vector<4x1xf32>
    %32 = vector.shape_cast %31 : vector<4x1xf32> to vector<1x4x1xf32>
    %cst_12 = arith.constant dense<0.000000e+00> : vector<1xf32>
    %33 = vector.multi_reduction <add>, %32, %cst_12 [1, 2] : vector<1x4x1xf32> to vector<1xf32>
    %34 = vector.shape_cast %33 : vector<1xf32> to vector<1x1x1xf32>
    %35 = vector.extract %34[0, 0, 0] : f32 from vector<1x1x1xf32>
    %36 = vector.broadcast %35 : f32 to vector<1x1xf32>
    %cst_13 = arith.constant 9.765625E-4 : f32
    %37 = vector.broadcast %cst_13 : f32 to vector<1x1xf32>
    %38 = arith.mulf %36, %37 : vector<1x1xf32>
    %39 = vector.shape_cast %14 : vector<1x1xf32> to vector<1x1xf32>
    %40 = vector.broadcast %39 : vector<1x1xf32> to vector<4x1xf32>
    %41 = vector.shape_cast %22 : vector<1x1xf32> to vector<1x1xf32>
    %42 = vector.broadcast %41 : vector<1x1xf32> to vector<4x1xf32>
    %43 = vector.shape_cast %30 : vector<1x1xf32> to vector<1x1xf32>
    %44 = vector.broadcast %43 : vector<1x1xf32> to vector<4x1xf32>
    %45 = vector.shape_cast %38 : vector<1x1xf32> to vector<1x1xf32>
    %46 = vector.broadcast %45 : vector<1x1xf32> to vector<4x1xf32>
    %47 = tpu.concatenate %40, %42, %44, %46 in 0 : vector<4x1xf32>, vector<4x1xf32>, vector<4x1xf32>, vector<4x1xf32> -> vector<16x1xf32>
    %48 = vector.broadcast %47 : vector<16x1xf32> to vector<16x256xf32>
    %49 = arith.subf %1, %48 : vector<16x256xf32>
    %50 = arith.mulf %49, %49 : vector<16x256xf32>
    %cst_14 = arith.constant dense<0.000000e+00> : vector<16xf32>
    %51 = vector.multi_reduction <add>, %50, %cst_14 [1] : vector<16x256xf32> to vector<16xf32>
    %52 = vector.shape_cast %51 : vector<16xf32> to vector<16x1xf32>
    %53 = vector.extract_strided_slice %52 {offsets = [0, 0], sizes = [4, 1], strides = [1, 1]} : vector<16x1xf32> to vector<4x1xf32>
    %54 = vector.shape_cast %53 : vector<4x1xf32> to vector<1x4x1xf32>
    %cst_15 = arith.constant dense<0.000000e+00> : vector<1xf32>
    %55 = vector.multi_reduction <add>, %54, %cst_15 [1, 2] : vector<1x4x1xf32> to vector<1xf32>
    %56 = vector.shape_cast %55 : vector<1xf32> to vector<1x1x1xf32>
    %57 = vector.extract %56[0, 0, 0] : f32 from vector<1x1x1xf32>
    %58 = vector.broadcast %57 : f32 to vector<1x1xf32>
    %cst_16 = arith.constant 0.000000e+00 : f32
    %59 = vector.broadcast %cst_16 : f32 to vector<1x1xf32>
    %60 = arith.mulf %59, %14 : vector<1x1xf32>
    %61 = arith.mulf %60, %14 : vector<1x1xf32>
    %62 = arith.subf %58, %61 : vector<1x1xf32>
    %cst_17 = arith.constant 9.765625E-4 : f32
    %63 = vector.broadcast %cst_17 : f32 to vector<1x1xf32>
    %64 = arith.mulf %62, %63 : vector<1x1xf32>
    %cst_18 = arith.constant 9.99999974E-6 : f32
    %65 = vector.broadcast %cst_18 : f32 to vector<1x1xf32>
    %66 = arith.addf %64, %65 : vector<1x1xf32>
    %67 = math.rsqrt %66 : vector<1x1xf32>
    %68 = vector.extract_strided_slice %52 {offsets = [4, 0], sizes = [4, 1], strides = [1, 1]} : vector<16x1xf32> to vector<4x1xf32>
    %69 = vector.shape_cast %68 : vector<4x1xf32> to vector<1x4x1xf32>
    %cst_19 = arith.constant dense<0.000000e+00> : vector<1xf32>
    %70 = vector.multi_reduction <add>, %69, %cst_19 [1, 2] : vector<1x4x1xf32> to vector<1xf32>
    %71 = vector.shape_cast %70 : vector<1xf32> to vector<1x1x1xf32>
    %72 = vector.extract %71[0, 0, 0] : f32 from vector<1x1x1xf32>
    %73 = vector.broadcast %72 : f32 to vector<1x1xf32>
    %cst_20 = arith.constant 0.000000e+00 : f32
    %74 = vector.broadcast %cst_20 : f32 to vector<1x1xf32>
    %75 = arith.mulf %74, %22 : vector<1x1xf32>
    %76 = arith.mulf %75, %22 : vector<1x1xf32>
    %77 = arith.subf %73, %76 : vector<1x1xf32>
    %cst_21 = arith.constant 9.765625E-4 : f32
    %78 = vector.broadcast %cst_21 : f32 to vector<1x1xf32>
    %79 = arith.mulf %77, %78 : vector<1x1xf32>
    %cst_22 = arith.constant 9.99999974E-6 : f32
    %80 = vector.broadcast %cst_22 : f32 to vector<1x1xf32>
    %81 = arith.addf %79, %80 : vector<1x1xf32>
    %82 = math.rsqrt %81 : vector<1x1xf32>
    %83 = vector.extract_strided_slice %52 {offsets = [8, 0], sizes = [4, 1], strides = [1, 1]} : vector<16x1xf32> to vector<4x1xf32>
    %84 = vector.shape_cast %83 : vector<4x1xf32> to vector<1x4x1xf32>
    %cst_23 = arith.constant dense<0.000000e+00> : vector<1xf32>
    %85 = vector.multi_reduction <add>, %84, %cst_23 [1, 2] : vector<1x4x1xf32> to vector<1xf32>
    %86 = vector.shape_cast %85 : vector<1xf32> to vector<1x1x1xf32>
    %87 = vector.extract %86[0, 0, 0] : f32 from vector<1x1x1xf32>
    %88 = vector.broadcast %87 : f32 to vector<1x1xf32>
    %cst_24 = arith.constant 0.000000e+00 : f32
    %89 = vector.broadcast %cst_24 : f32 to vector<1x1xf32>
    %90 = arith.mulf %89, %30 : vector<1x1xf32>
    %91 = arith.mulf %90, %30 : vector<1x1xf32>
    %92 = arith.subf %88, %91 : vector<1x1xf32>
    %cst_25 = arith.constant 9.765625E-4 : f32
    %93 = vector.broadcast %cst_25 : f32 to vector<1x1xf32>
    %94 = arith.mulf %92, %93 : vector<1x1xf32>
    %cst_26 = arith.constant 9.99999974E-6 : f32
    %95 = vector.broadcast %cst_26 : f32 to vector<1x1xf32>
    %96 = arith.addf %94, %95 : vector<1x1xf32>
    %97 = math.rsqrt %96 : vector<1x1xf32>
    %98 = vector.extract_strided_slice %52 {offsets = [12, 0], sizes = [4, 1], strides = [1, 1]} : vector<16x1xf32> to vector<4x1xf32>
    %99 = vector.shape_cast %98 : vector<4x1xf32> to vector<1x4x1xf32>
    %cst_27 = arith.constant dense<0.000000e+00> : vector<1xf32>
    %100 = vector.multi_reduction <add>, %99, %cst_27 [1, 2] : vector<1x4x1xf32> to vector<1xf32>
    %101 = vector.shape_cast %100 : vector<1xf32> to vector<1x1x1xf32>
    %102 = vector.extract %101[0, 0, 0] : f32 from vector<1x1x1xf32>
    %103 = vector.broadcast %102 : f32 to vector<1x1xf32>
    %cst_28 = arith.constant 0.000000e+00 : f32
    %104 = vector.broadcast %cst_28 : f32 to vector<1x1xf32>
    %105 = arith.mulf %104, %38 : vector<1x1xf32>
    %106 = arith.mulf %105, %38 : vector<1x1xf32>
    %107 = arith.subf %103, %106 : vector<1x1xf32>
    %cst_29 = arith.constant 9.765625E-4 : f32
    %108 = vector.broadcast %cst_29 : f32 to vector<1x1xf32>
    %109 = arith.mulf %107, %108 : vector<1x1xf32>
    %cst_30 = arith.constant 9.99999974E-6 : f32
    %110 = vector.broadcast %cst_30 : f32 to vector<1x1xf32>
    %111 = arith.addf %109, %110 : vector<1x1xf32>
    %112 = math.rsqrt %111 : vector<1x1xf32>
    %113 = vector.shape_cast %67 : vector<1x1xf32> to vector<1x1xf32>
    %114 = vector.broadcast %113 : vector<1x1xf32> to vector<4x1xf32>
    %115 = vector.shape_cast %82 : vector<1x1xf32> to vector<1x1xf32>
    %116 = vector.broadcast %115 : vector<1x1xf32> to vector<4x1xf32>
    %117 = vector.shape_cast %97 : vector<1x1xf32> to vector<1x1xf32>
    %118 = vector.broadcast %117 : vector<1x1xf32> to vector<4x1xf32>
    %119 = vector.shape_cast %112 : vector<1x1xf32> to vector<1x1xf32>
    %120 = vector.broadcast %119 : vector<1x1xf32> to vector<4x1xf32>
    %121 = tpu.concatenate %114, %116, %118, %120 in 0 : vector<4x1xf32>, vector<4x1xf32>, vector<4x1xf32>, vector<4x1xf32> -> vector<16x1xf32>
    %122 = arith.mulf %121, %2 : vector<16x1xf32>
    %123 = vector.broadcast %122 : vector<16x1xf32> to vector<16x256xf32>
    %124 = arith.mulf %49, %123 : vector<16x256xf32>
    %125 = vector.broadcast %3 : vector<16x1xf32> to vector<16x256xf32>
    %126 = arith.addf %124, %125 : vector<16x256xf32>
    %127 = vector.broadcast %4 : vector<16x1xf32> to vector<16x256xf32>
    %128 = arith.mulf %126, %127 : vector<16x256xf32>
    %129 = arith.negf %128 : vector<16x256xf32>
    %130 = math.exp %129 : vector<16x256xf32>
    %cst_31 = arith.constant 1.000000e+00 : f32
    %131 = vector.broadcast %cst_31 : f32 to vector<16x256xf32>
    %132 = arith.addf %131, %130 : vector<16x256xf32>
    %133 = arith.divf %131, %132 : vector<16x256xf32>
    %134 = arith.mulf %133, %1 : vector<16x256xf32>
    %cst_32 = arith.constant 5.000000e-01 : f32
    %135 = vector.broadcast %cst_32 : f32 to vector<16x256xf32>
    %136 = arith.cmpf ogt, %133, %135 : vector<16x256xf32>
    %137 = arith.select %136, %1, %134 : vector<16x256xi1>, vector<16x256xf32>
    %cst_33 = arith.constant 0.000000e+00 : f32
    %138 = vector.broadcast %cst_33 : f32 to vector<16x256xf32>
    %139 = arith.select %136, %138, %134 : vector<16x256xi1>, vector<16x256xf32>
    %c8_i32 = arith.constant 8 : i32
    %140 = tpu.dynamic_rotate %139 by %c8_i32 dim 0 : vector<16x256xf32>, i32 -> vector<16x256xf32>
    %141 = arith.addf %137, %140 : vector<16x256xf32>
    %c0_34 = arith.constant 0 : index
    %c0_35 = arith.constant 0 : index
    %c0_36 = arith.constant 0 : index
    %142 = vector.load %arg3[%c0_34, %c0_35, %c0_36] : memref<1x16x256xf32, #tpu.memory_space<vmem>>, vector<1x16x256xf32>
    %143 = vector.shape_cast %142 : vector<1x16x256xf32> to vector<16x256xf32>
    %144 = vector.shape_cast %141 : vector<16x256xf32> to vector<1x16x256xf32>
    tpu.vector_store %arg3[%c0_34, %c0_35, %c0_36], %144 {strides = array<i32>} : memref<1x16x256xf32, #tpu.memory_space<vmem>>, vector<1x16x256xf32>,
    return
  }
  func.func @transform_0(%arg0: i32) -> (i32, i32, i32) {
    %c0_i32 = arith.constant 0 : i32
    %c0_i32_0 = arith.constant 0 : i32
    %c0_i32_1 = arith.constant 0 : i32
    return %arg0, %c0_i32, %c0_i32_0 : i32, i32, i32
  }
  func.func @transform_1(%arg0: i32) -> (i32, i32) {
    %c0_i32 = arith.constant 0 : i32
    %c0_i32_0 = arith.constant 0 : i32
    %c0_i32_1 = arith.constant 0 : i32
    return %c0_i32, %c0_i32_0 : i32, i32
  }
  func.func @transform_2(%arg0: i32) -> (i32, i32, i32) {
    %c0_i32 = arith.constant 0 : i32
    %c0_i32_0 = arith.constant 0 : i32
    %c0_i32_1 = arith.constant 0 : i32
    return %arg0, %c0_i32, %c0_i32_0 : i32, i32, i32
  }
}

</mosaic_0001>

<llo_original>
// kernel: tpu_custom_call.1
$region0: #{tpu_custom_call.1}
  #allocation0 [shape = 'u32[]', space=smem, size = 0x4, offset = 0x4, fixed_abs, tag = 'smem constant byte address 0x4 - core index']
  #allocation1 [shape = 'u32[144,128]{1,0:T(1,128)}', space=vmem, size = 0x12000, scoped, tag = 'internal scratch']
  %s0 = inlined_call_operand.hbm [shape: f32[2,16,256], index: 0, kind: input, shape index: {}]
  %s1 = inlined_call_operand.vmem [shape: f32[16,4], index: 1, kind: input, shape index: {}]
  %s2 = inlined_call_operand.hbm [shape: f32[2,16,256], index: 2, kind: output, shape index: {}]
  %s3 = sld [smem:[#allocation0]]
  $region45: #{tpu_custom_call.1} parent=0
    _
  %s5 = ssub.s32 1, %s3
  %s6 = scalar_select 0, %s5, %s3
  $region1: #{tpu_custom_call.1} parent=0
    #allocation2 [shape = 'u8[32768]{0}', space=vmem, size = 0x8000, scoped, tag = 'input window, operand 0']
    #allocation3 [shape = 's32[2]{0}', space=sflag, size = 0x8, scoped, tag = 'scoped memory for tpu_custom_call.1']
    #allocation4 [shape = 's32[2]{0}', space=sflag, size = 0x8, scoped, tag = 'scoped memory for tpu_custom_call.1']
    #allocation5 [shape = 'u8[32768]{0}', space=vmem, size = 0x8000, scoped, tag = 'output window, operand 0']
    %7 = vsyncpa [#allocation3], 0
    %s8 = scalar_lea.sflag [#allocation3], 1
    %9 = vsyncpa %s8, 0
    %10 = vsyncpa [#allocation4], 0
    %s11 = scalar_lea.sflag [#allocation4], 1
    %12 = vsyncpa %s11, 0
    loop: start=0, step=1, limit=4
    $region2: #{tpu_custom_call.1} parent=1 // loop_pre_header
      _
    $region3: #{tpu_custom_call.1} parent=1 // loop_header
      %s14 = sphi 0, %s18
      %p15 = scmp.ge.s32.totalorder %s14, 4
      %s24 = sphi 0, %s26
      %s27 = sphi 0, %s24
      %s28 = sphi 0, %s27
      %s44 = sphi 0, %s28
      %s48 = sphi 0, %s48
      %s50 = sphi 0, %s48
      %s51 = sphi 0, %s50
      %s65 = sphi 0, %s51
      %s71 = sphi 0, %s73
      %s74 = sphi 0, %s71
      %s75 = sphi 0, %s74
      %s91 = sphi 0, %s75
    $region4: #{tpu_custom_call.1} parent=1 // loop_header_branch
      %17 = sbr.rel (%p15) target = $region8
    $region5: #{tpu_custom_call.1} parent=1 // loop_body
      %s19 = ssub.s32 %s14, 1
      %s20 = ssub.s32 %s14, 2
      %s21 = sadd.s32 %s14, 1
      %s22 = ssub.s32 %s14, %s21
      %p23 = scmp.eq.s32.totalorder %s22, 0
      %s25 = sadd.s32 %s24, 1
      %s26 = scalar_select %p23, %s24, %s25
      %p29 = pneg %p23
      %p30 = scmp.eq.s32.totalorder %s14, 1
      %p31 = por %p29, %p30
      %p32 = scmp.ne.s32.totalorder %s24, %s27
      %p33 = scmp.eq.s32.totalorder %s14, 0
      %p34 = por %p32, %p33
      %p35 = scmp.ne.s32.totalorder %s24, %s27
      %p36 = scmp.eq.s32.totalorder %s19, 1
      %p37 = por %p35, %p36
      %p38 = scmp.ne.s32.totalorder %s27, %s28
      %p39 = scmp.eq.s32.totalorder %s19, 0
      %p40 = por %p38, %p39
      %p41 = scmp.ne.s32.totalorder %s27, %s28
      %p42 = scmp.eq.s32.totalorder %s20, 1
      %p43 = por %p41, %p42
      %p45 = scmp.ne.s32.totalorder %s28, %s44
      %p46 = scmp.eq.s32.totalorder %s20, 0
      %p47 = por %p45, %p46
      %s49 = sadd.s32 %s48, 1
      %p52 = scmp.eq.s32.totalorder %s14, 1
      %p53 = scmp.ne.s32.totalorder %s48, %s50
      %p54 = scmp.eq.s32.totalorder %s14, 0
      %p55 = por %p53, %p54
      %p56 = scmp.ne.s32.totalorder %s48, %s50
      %p57 = scmp.eq.s32.totalorder %s19, 1
      %p58 = por %p56, %p57
      %p59 = scmp.ne.s32.totalorder %s50, %s51
      %p60 = scmp.eq.s32.totalorder %s19, 0
      %p61 = por %p59, %p60
      %p62 = scmp.ne.s32.totalorder %s50, %s51
      %p63 = scmp.eq.s32.totalorder %s20, 1
      %p64 = por %p62, %p63
      %p66 = scmp.ne.s32.totalorder %s51, %s65
      %p67 = scmp.eq.s32.totalorder %s20, 0
      %p68 = por %p66, %p67
      %s69 = ssub.s32 %s14, %s21
      %p70 = scmp.eq.s32.totalorder %s69, 0
      %s72 = sadd.s32 %s71, 1
      %s73 = scalar_select %p70, %s71, %s72
      %p76 = pneg %p70
      %p77 = scmp.eq.s32.totalorder %s14, 1
      %p78 = por %p76, %p77
      %p79 = scmp.ne.s32.totalorder %s71, %s74
      %p80 = scmp.eq.s32.totalorder %s14, 0
      %p81 = por %p79, %p80
      %p82 = scmp.ne.s32.totalorder %s71, %s74
      %p83 = scmp.eq.s32.totalorder %s19, 1
      %p84 = por %p82, %p83
      %p85 = scmp.ne.s32.totalorder %s74, %s75
      %p86 = scmp.eq.s32.totalorder %s19, 0
      %p87 = por %p85, %p86
      %p88 = scmp.ne.s32.totalorder %s74, %s75
      %p89 = scmp.eq.s32.totalorder %s20, 1
      %p90 = por %p88, %p89
      %p92 = scmp.ne.s32.totalorder %s75, %s91
      %p93 = scmp.eq.s32.totalorder %s20, 0
      %p94 = por %p92, %p93
      %p95 = scmp.le.s32.totalorder 1, %s14
      %p96 = scmp.lt.s32.totalorder %s14, 3
      %p97 = pnand %p95, %p96
      %p98 = pneg %p97
      // Predicated region
      $region9: #{tpu_custom_call.1} parent=5 // pred_check
        _
      $region10: #{tpu_custom_call.1} parent=5 // pred_check_branch
        %100 = sbr.rel (%p97) target = $region12
      $region11: #{tpu_custom_call.1} parent=5 // pred_region
        %s101 = ssub.s32 %s14, 1
        // Predicated region
        $region13: #{tpu_custom_call.1} parent=11 // pred_check
          %p102 = pneg %p61
        $region14: #{tpu_custom_call.1} parent=11 // pred_check_branch
          %104 = sbr.rel (%p102) target = $region16
        $region15: #{tpu_custom_call.1} parent=11 // pred_region
          _
        $region16: #{tpu_custom_call.1} parent=11 // pred_fallthru
          _
      $region12: #{tpu_custom_call.1} parent=5 // pred_fallthru
        _
      %p105 = scmp.lt.s32.totalorder %s14, 2
      // Predicated region
      $region17: #{tpu_custom_call.1} parent=5 // pred_check
        %p106 = pneg %p105
      $region18: #{tpu_custom_call.1} parent=5 // pred_check_branch
        %108 = sbr.rel (%p106) target = $region20
      $region19: #{tpu_custom_call.1} parent=5 // pred_region
        // Predicated region
        $region21: #{tpu_custom_call.1} parent=19 // pred_check
          %p109 = pneg %p34
        $region22: #{tpu_custom_call.1} parent=19 // pred_check_branch
          %111 = sbr.rel (%p109) target = $region24
        $region23: #{tpu_custom_call.1} parent=19 // pred_region
          %s112 = sand.u32 %s24, 1
          %s113 = scalar_lea.sflag [#allocation3], %s112
          %s114 = sand.u32 %s24, 1
          %s115 = smul.addr %s114, 32
          %s116 = scalar_lea.vmem [#allocation2], %s115
          %s118 = ssub.s32 512, 512
          %119 = vsyncadd %s113, %s118
          %s120 = smul.addr %s14, 4
          %s121 = smul.addr %s120, 128
          %s122 = scalar_lea.hbm %s0, %s121
          %s123 = sshll.u32 %s116, 4
          %s124 = int_to_ptr.vmem [resolvable:$true] %s123
          %129 = dma.hbm_to_vmem [thread:$0]  %s122, 512, %s124, %s113, 256, 256, 16
        $region24: #{tpu_custom_call.1} parent=19 // pred_fallthru
          _
      $region20: #{tpu_custom_call.1} parent=5 // pred_fallthru
        _
      %p130 = scmp.le.s32.totalorder 1, %s14
      %p131 = scmp.lt.s32.totalorder %s14, 3
      %p132 = pnand %p130, %p131
      %p133 = pneg %p132
      // Predicated region
      $region25: #{tpu_custom_call.1} parent=5 // pred_check
        _
      $region26: #{tpu_custom_call.1} parent=5 // pred_check_branch
        %135 = sbr.rel (%p132) target = $region28
      $region27: #{tpu_custom_call.1} parent=5 // pred_region
        %s136 = ssub.s32 %s14, 1
        %s137 = sand.u32 %s27, 1
        %s138 = scalar_lea.sflag [#allocation3], %s137
        %s139 = sand.u32 %s27, 1
        %s140 = smul.addr %s139, 32
        %s141 = scalar_lea.vmem [#allocation2], %s140
        // Predicated region
        $region29: #{tpu_custom_call.1} parent=27 // pred_check
          %p142 = pneg %p40
        $region30: #{tpu_custom_call.1} parent=27 // pred_check_branch
          %144 = sbr.rel (%p142) target = $region32
        $region31: #{tpu_custom_call.1} parent=27 // pred_region
          %145 = dma.done %s138, 512
        $region32: #{tpu_custom_call.1} parent=27 // pred_fallthru
          _
        %s146 = sand.u32 %s27, 1
        %s147 = scalar_lea.sflag [#allocation3], %s146
        %s148 = sand.u32 %s27, 1
        %s149 = smul.addr %s148, 32
        %s150 = scalar_lea.vmem [#allocation2], %s149
        %p151 = pneg %p40
        %p152 = pneg %p37
        %p153 = pneg %p61
        %p154 = pneg %p58
        %p155 = pneg %p87
        %p156 = pneg %p84
        %s157 = sand.u32 %s74, 1
        %s158 = scalar_lea.sflag [#allocation4], %s157
        %s159 = sand.u32 %s74, 1
        %s160 = smul.addr %s159, 32
        %s161 = scalar_lea.vmem [#allocation5], %s160
        %v162 = vld [vmem:[%s141] sm:$0xff]
        %v163 = vld [vmem:[%s141 + $0x8] sm:$0xff]
        %v164 = vld [vmem:[%s141 + $0x10] sm:$0xff]
        %v165 = vld [vmem:[%s141 + $0x18] sm:$0xff]
        %v166 = vld [vmem:[%s1] sm:$0xff]
        %v167 = vld [vmem:[%s1 + $0x8] sm:$0xff]
        %v168 = vadd.f32 %v162, %v163
        %169 = vadd.xlane.f32.xlu0 %v168
        %v170 = vpop.xlane.xlu0 %169
        %v171 = vadd.f32 %v164, %v165
        %172 = vadd.xlane.f32.xlu0 %v171
        %v173 = vpop.xlane.xlu0 %172
        %vm174 = vcmask 3072
        %v175 = vsel %vm174, %v170, 0.0
        %176 = vadd.xlane.f32.xlu0 %v175
        %v177 = vpop.xlane.xlu0 %176
        %v178 = vrot.slane %v177, 4
        %v179 = vadd.f32 %v177, %v178
        %v180 = vrot.slane %v179, 2
        %v181 = vadd.f32 %v179, %v180
        %v182 = vrot.slane %v181, 1
        %v183 = vadd.f32 %v181, %v182
        %s184 = vtos %v183
        %v185 = vstv %s184
        %v186 = vmul.f32 %v185, 0.0009765625
        %v188 = vrot.slane %v170, 4
        %v190 = vsel %vm174, %v188, 0.0
        %191 = vadd.xlane.f32.xlu0 %v190
        %v192 = vpop.xlane.xlu0 %191
        %v193 = vrot.slane %v192, 4
        %v194 = vadd.f32 %v192, %v193
        %v195 = vrot.slane %v194, 2
        %v196 = vadd.f32 %v194, %v195
        %v197 = vrot.slane %v196, 1
        %v198 = vadd.f32 %v196, %v197
        %s199 = vtos %v198
        %v200 = vstv %s199
        %v201 = vmul.f32 %v200, 0.0009765625
        %v202 = vsel %vm174, %v173, 0.0
        %203 = vadd.xlane.f32.xlu0 %v202
        %v204 = vpop.xlane.xlu0 %203
        %v205 = vrot.slane %v204, 4
        %v206 = vadd.f32 %v204, %v205
        %v207 = vrot.slane %v206, 2
        %v208 = vadd.f32 %v206, %v207
        %v209 = vrot.slane %v208, 1
        %v210 = vadd.f32 %v208, %v209
        %s211 = vtos %v210
        %v212 = vstv %s211
        %v213 = vmul.f32 %v212, 0.0009765625
        %v215 = vrot.slane %v173, 4
        %v217 = vsel %vm174, %v215, 0.0
        %218 = vadd.xlane.f32.xlu0 %v217
        %v219 = vpop.xlane.xlu0 %218
        %v220 = vrot.slane %v219, 4
        %v221 = vadd.f32 %v219, %v220
        %v222 = vrot.slane %v221, 2
        %v223 = vadd.f32 %v221, %v222
        %v224 = vrot.slane %v223, 1
        %v225 = vadd.f32 %v223, %v224
        %s226 = vtos %v225
        %v227 = vstv %s226
        %v228 = vmul.f32 %v227, 0.0009765625
        %vm229 = vcmask 1043456
        %v230 = vsel %vm229, %v186, %v201
        %v231 = vsel %vm229, %v213, %v228
        %233 = vset.pattern.permute.xlu0 0
        %234 = vperm.xlu0 %233, %v230
        %v235 = vpop.permute.xlu0 %234
        %238 = vset.pattern.permute.xlu0 0
        %239 = vperm.xlu0 %238, %v231
        %v240 = vpop.permute.xlu0 %239
        %v242 = vsub.f32 %v162, %v235
        %v243 = vsub.f32 %v163, %v235
        %v244 = vsub.f32 %v164, %v240
        %v245 = vsub.f32 %v165, %v240
        %v246 = vmul.f32 %v242, %v242
        %v247 = vmul.f32 %v243, %v243
        %v248 = vmul.f32 %v244, %v244
        %v249 = vmul.f32 %v245, %v245
        %v250 = vadd.f32 %v246, %v247
        %251 = vadd.xlane.f32.xlu0 %v250
        %v252 = vpop.xlane.xlu0 %251
        %v253 = vadd.f32 %v248, %v249
        %254 = vadd.xlane.f32.xlu0 %v253
        %v255 = vpop.xlane.xlu0 %254
        %v256 = vsel %vm174, %v252, 0.0
        %257 = vadd.xlane.f32.xlu0 %v256
        %v258 = vpop.xlane.xlu0 %257
        %v259 = vrot.slane %v258, 4
        %v260 = vadd.f32 %v258, %v259
        %v261 = vrot.slane %v260, 2
        %v262 = vadd.f32 %v260, %v261
        %v263 = vrot.slane %v262, 1
        %v264 = vadd.f32 %v262, %v263
        %s265 = vtos %v264
        %v266 = vstv %s265
        %v267 = vmul.f32 %v186, 0.0
        %v268 = vmul.f32 %v267, %v186
        %v269 = vsub.f32 %v266, %v268
        %v270 = vmul.f32 %v269, 0.0009765625
        %v271 = vadd.f32 %v270, 1e-05
        %v272 = vrsqrt.pop %v271
        %v274 = vrot.slane %v252, 4
        %v276 = vsel %vm174, %v274, 0.0
        %277 = vadd.xlane.f32.xlu0 %v276
        %v278 = vpop.xlane.xlu0 %277
        %v279 = vrot.slane %v278, 4
        %v280 = vadd.f32 %v278, %v279
        %v281 = vrot.slane %v280, 2
        %v282 = vadd.f32 %v280, %v281
        %v283 = vrot.slane %v282, 1
        %v284 = vadd.f32 %v282, %v283
        %s285 = vtos %v284
        %v286 = vstv %s285
        %v287 = vmul.f32 %v201, 0.0
        %v288 = vmul.f32 %v287, %v201
        %v289 = vsub.f32 %v286, %v288
        %v290 = vmul.f32 %v289, 0.0009765625
        %v291 = vadd.f32 %v290, 1e-05
        %v292 = vrsqrt.pop %v291
        %v293 = vsel %vm174, %v255, 0.0
        %294 = vadd.xlane.f32.xlu0 %v293
        %v295 = vpop.xlane.xlu0 %294
        %v296 = vrot.slane %v295, 4
        %v297 = vadd.f32 %v295, %v296
        %v298 = vrot.slane %v297, 2
        %v299 = vadd.f32 %v297, %v298
        %v300 = vrot.slane %v299, 1
        %v301 = vadd.f32 %v299, %v300
        %s302 = vtos %v301
        %v303 = vstv %s302
        %v304 = vmul.f32 %v213, 0.0
        %v305 = vmul.f32 %v304, %v213
        %v306 = vsub.f32 %v303, %v305
        %v307 = vmul.f32 %v306, 0.0009765625
        %v308 = vadd.f32 %v307, 1e-05
        %v309 = vrsqrt.pop %v308
        %v311 = vrot.slane %v255, 4
        %v313 = vsel %vm174, %v311, 0.0
        %314 = vadd.xlane.f32.xlu0 %v313
        %v315 = vpop.xlane.xlu0 %314
        %v316 = vrot.slane %v315, 4
        %v317 = vadd.f32 %v315, %v316
        %v318 = vrot.slane %v317, 2
        %v319 = vadd.f32 %v317, %v318
        %v320 = vrot.slane %v319, 1
        %v321 = vadd.f32 %v319, %v320
        %s322 = vtos %v321
        %v323 = vstv %s322
        %v324 = vmul.f32 %v228, 0.0
        %v325 = vmul.f32 %v324, %v228
        %v326 = vsub.f32 %v323, %v325
        %v327 = vmul.f32 %v326, 0.0009765625
        %v328 = vadd.f32 %v327, 1e-05
        %v329 = vrsqrt.pop %v328
        %v330 = vsel %vm229, %v272, %v292
        %v331 = vsel %vm229, %v309, %v329
        %v332 = vmul.f32 %v330, %v166
        %v333 = vmul.f32 %v331, %v167
        %335 = vset.pattern.permute.xlu0 0
        %336 = vperm.xlu0 %335, %v332
        %v337 = vpop.permute.xlu0 %336
        %340 = vset.pattern.permute.xlu0 0
        %341 = vperm.xlu0 %340, %v333
        %v342 = vpop.permute.xlu0 %341
        %v344 = vmul.f32 %v242, %v337
        %v345 = vmul.f32 %v243, %v337
        %v346 = vmul.f32 %v244, %v342
        %v347 = vmul.f32 %v245, %v342
        %349 = vset.pattern.permute.xlu0 1
        %350 = vperm.xlu0 %349, %v166
        %v351 = vpop.permute.xlu0 %350
        %354 = vset.pattern.permute.xlu0 1
        %355 = vperm.xlu0 %354, %v167
        %v356 = vpop.permute.xlu0 %355
        %v358 = vadd.f32 %v344, %v351
        %v359 = vadd.f32 %v345, %v351
        %v360 = vadd.f32 %v346, %v356
        %v361 = vadd.f32 %v347, %v356
        %362 = vset.pattern.permute.xlu0 2
        %363 = vperm.xlu0 %362, %v166
        %v364 = vpop.permute.xlu0 %363
        %366 = vset.pattern.permute.xlu0 2
        %367 = vperm.xlu0 %366, %v167
        %v368 = vpop.permute.xlu0 %367
        %v370 = vmul.f32 %v358, %v364
        %v371 = vmul.f32 %v359, %v364
        %v372 = vmul.f32 %v360, %v368
        %v373 = vmul.f32 %v361, %v368
        %v374 = vxor.u32 %v370, 2147483648
        %v375 = vxor.u32 %v371, 2147483648
        %v376 = vxor.u32 %v372, 2147483648
        %v377 = vxor.u32 %v373, 2147483648
        %v378 = vmul.f32 %v374, 1.442695
        %v379 = vpow.pop %v378
        %v380 = vmul.f32 %v375, 1.442695
        %v381 = vpow.pop %v380
        %v382 = vmul.f32 %v376, 1.442695
        %v383 = vpow.pop %v382
        %v384 = vmul.f32 %v377, 1.442695
        %v385 = vpow.pop %v384
        %v386 = vadd.f32 %v379, 1.0
        %v387 = vadd.f32 %v381, 1.0
        %v388 = vadd.f32 %v383, 1.0
        %v389 = vadd.f32 %v385, 1.0
        %v390 = vrcp.pop %v386
        %v391 = vmul.f32 1.0, %v390
        %v392 = vrcp.pop %v387
        %v393 = vmul.f32 1.0, %v392
        %v394 = vrcp.pop %v388
        %v395 = vmul.f32 1.0, %v394
        %v396 = vrcp.pop %v389
        %v397 = vmul.f32 1.0, %v396
        %v398 = vmul.f32 %v391, %v162
        %v399 = vmul.f32 %v393, %v163
        %v400 = vmul.f32 %v395, %v164
        %v401 = vmul.f32 %v397, %v165
        %vm402 = vcmp.gt.f32.partialorder %v391, 0.5
        %vm403 = vcmp.gt.f32.partialorder %v393, 0.5
        %vm404 = vcmp.gt.f32.partialorder %v395, 0.5
        %vm405 = vcmp.gt.f32.partialorder %v397, 0.5
        %v406 = vsel %vm402, %v162, %v398
        %v407 = vsel %vm403, %v163, %v399
        %v408 = vsel %vm404, %v164, %v400
        %v409 = vsel %vm405, %v165, %v401
        %v410 = vsel %vm402, 0.0, %v398
        %v411 = vsel %vm403, 0.0, %v399
        %v412 = vsel %vm404, 0.0, %v400
        %v413 = vsel %vm405, 0.0, %v401
        %v414 = vadd.f32 %v406, %v412
        %v415 = vadd.f32 %v407, %v413
        %v416 = vadd.f32 %v408, %v410
        %v417 = vadd.f32 %v409, %v411
        %418 = vst [vmem:[%s161] sm:$0xff] %v414
        %419 = vst [vmem:[%s161 + $0x8] sm:$0xff] %v415
        %420 = vst [vmem:[%s161 + $0x10] sm:$0xff] %v416
        %421 = vst [vmem:[%s161 + $0x18] sm:$0xff] %v417
        %s422 = sand.u32 %s74, 1
        %s423 = scalar_lea.sflag [#allocation4], %s422
        %s424 = sand.u32 %s74, 1
        %s425 = smul.addr %s424, 32
        %s426 = scalar_lea.vmem [#allocation5], %s425
        // Predicated region
        $region33: #{tpu_custom_call.1} parent=27 // pred_check
          %p427 = pneg %p84
        $region34: #{tpu_custom_call.1} parent=27 // pred_check_branch
          %429 = sbr.rel (%p427) target = $region36
        $region35: #{tpu_custom_call.1} parent=27 // pred_region
          %s431 = ssub.s32 512, 512
          %432 = vsyncadd %s423, %s431
          %s433 = smul.addr %s19, 4
          %s434 = smul.addr %s433, 128
          %s435 = scalar_lea.hbm %s2, %s434
          %s436 = sshll.u32 %s426, 4
          %s437 = int_to_ptr.vmem [resolvable:$true] %s436
          %442 = dma.vmem_to_hbm [thread:$0]  %s437, 512, %s435, %s423, 256, 256, 16
        $region36: #{tpu_custom_call.1} parent=27 // pred_fallthru
          _
      $region28: #{tpu_custom_call.1} parent=5 // pred_fallthru
        _
      %p443 = scmp.le.s32.totalorder 2, %s14
      // Predicated region
      $region37: #{tpu_custom_call.1} parent=5 // pred_check
        %p444 = pneg %p443
      $region38: #{tpu_custom_call.1} parent=5 // pred_check_branch
        %446 = sbr.rel (%p444) target = $region40
      $region39: #{tpu_custom_call.1} parent=5 // pred_region
        %s447 = ssub.s32 %s14, 2
        // Predicated region
        $region41: #{tpu_custom_call.1} parent=39 // pred_check
          %p448 = pneg %p90
        $region42: #{tpu_custom_call.1} parent=39 // pred_check_branch
          %450 = sbr.rel (%p448) target = $region44
        $region43: #{tpu_custom_call.1} parent=39 // pred_region
          %s451 = sand.u32 %s75, 1
          %s452 = scalar_lea.sflag [#allocation4], %s451
          %s453 = sand.u32 %s75, 1
          %s454 = smul.addr %s453, 32
          %s455 = scalar_lea.vmem [#allocation5], %s454
          %456 = dma.done %s452, 512
        $region44: #{tpu_custom_call.1} parent=39 // pred_fallthru
          _
      $region40: #{tpu_custom_call.1} parent=5 // pred_fallthru
        _
    $region6: #{tpu_custom_call.1} parent=1 // loop_footer
      %s18 = sadd.s32 1, %s14
    $region7: #{tpu_custom_call.1} parent=1 // loop_footer_branch
      %13 = sbr.rel target = $region3
    $region8: #{tpu_custom_call.1} parent=1 // loop_exit
      _
    %457 = vsyncpa [#allocation3], 1
    %s458 = scalar_lea.sflag [#allocation3], 1
    %459 = vsyncpa %s458, 1
    %460 = vsyncpa [#allocation4], 1
    %s461 = scalar_lea.sflag [#allocation4], 1
    %462 = vsyncpa %s461, 1

</llo_original>
